<compile_context>
chip_gen: v5e
topology: v5e:2x2
jax: 0.10.0
libtpu: 0.0.40
codegen_flags: <defaults>
</compile_context>

<pallas_src>
import functools

import jax
import jax.numpy as jnp
from jax.experimental import pallas as pl
from jax.experimental.pallas import tpu as pltpu

EPS = 1e-07


def _round_up(x, m):
    return (x + m - 1) // m * m


def _focal_loss_kernel(alpha_ref, yp_ref, yt_ref, out_ref, acc_ref,
                       *, gamma, n_rows, tile_m, tiles_per_split):
    s = pl.program_id(0)          # split (megacore "parallel" axis)
    i = pl.program_id(1)          # row-tile within split ("arbitrary" axis)

    @pl.when(i == 0)
    def _():
        acc_ref[...] = jnp.zeros_like(acc_ref)

    yp = yp_ref[...].astype(jnp.float32)          # (TM, C)
    yt = yt_ref[...].astype(jnp.float32)          # (TM, C)

    # Row-validity mask: handles both the padded rows and a partial last tile.
    tile_idx = s * tiles_per_split + i
    row0 = tile_idx * tile_m
    row_ids = row0 + jax.lax.broadcasted_iota(jnp.int32, yp.shape, 0)
    valid = row_ids < n_rows

    one_minus = 1.0 - yp
    if float(gamma) == int(gamma):
        # Integer gamma: stays on the VPU (no extra EUP transcendentals).
        mod = jax.lax.integer_pow(one_minus, int(gamma))
    else:
        # Non-integer gamma: exp/log path with a clamp to avoid log(0).
        mod = jnp.exp(jnp.float32(gamma) * jnp.log(jnp.maximum(one_minus, EPS)))

    ce = -jnp.log(yp + EPS) * yt
    focal = mod * ce                              # alpha applied at the end
    focal = jnp.where(valid, focal, 0.0)

    # Fold rows mod 8 into the (8, C) accumulator: elementwise vreg adds only,
    # no per-iteration XLU reduction and no scalar dependence chain.
    acc_ref[...] += jnp.sum(
        focal.reshape(tile_m // 8, 8, focal.shape[-1]), axis=0)

    @pl.when(i == pl.num_programs(1) - 1)
    def _():
        alpha = alpha_ref[...].astype(jnp.float32)        # (1, C) -> broadcasts
        # Single cross-lane/sublane reduction for this split's partial sum.
        out_ref[...] = jnp.sum(acc_ref[...] * alpha, keepdims=True)


def focal_loss(y_pred, y_true, alpha, gamma=2, tile_m=1024, n_splits=2):
    """Pallas FocalLoss forward. y_pred/y_true: (N, C). alpha: scalar or (C,)."""
    n, c = y_pred.shape
    alpha_arr = jnp.broadcast_to(
        jnp.asarray(alpha, jnp.float32), (c,)).reshape(1, c)

    # Pad rows to a multiple of 8 (sublane granularity) only if needed.
    n_pad = _round_up(n, 8)
    if n_pad != n:
        pad = n_pad - n
        y_pred = jnp.pad(y_pred, ((0, pad), (0, 0)))
        y_true = jnp.pad(y_true, ((0, pad), (0, 0)))

    # Tile sizing: multiple of 8, capped by N and by a conservative
    # double-buffered VMEM budget (2 inputs x 2 buffers x tile_m x C x 4B),
    # which fits the default scoped VMEM limit on v5e/v6e/v7x.
    vmem_budget = 16 * 1024 * 1024
    max_tile = max(8, (vmem_budget // (2 * 2 * c * 4)) // 8 * 8)
    tile_m = max(8, (int(tile_m) // 8) * 8)
    tile_m = min(tile_m, max_tile, n_pad)

    tiles_total = (n_pad + tile_m - 1) // tile_m
    # Megacore split (v7x): only when it divides evenly (no fully-OOB blocks).
    splits = n_splits if (n_splits > 1 and tiles_total % n_splits == 0) else 1
    tiles_per_split = tiles_total // splits

    # TODO(synk): for very large C, also tile the class dimension (second grid
    # axis in multiples of 128 lanes) to bound per-tile VMEM independent of C.

    kernel = functools.partial(
        _focal_loss_kernel, gamma=gamma, n_rows=n,
        tile_m=tile_m, tiles_per_split=tiles_per_split)

    partials = pl.pallas_call(
        kernel,
        out_shape=jax.ShapeDtypeStruct((splits, 1), jnp.float32),
        grid_spec=pltpu.PrefetchScalarGridSpec(
            num_scalar_prefetch=0,
            grid=(splits, tiles_per_split),
            in_specs=[
                pl.BlockSpec((1, c), lambda s, i: (0, 0)),          # alpha
                pl.BlockSpec((tile_m, c),
                             lambda s, i: (s * tiles_per_split + i, 0)),  # yPred
                pl.BlockSpec((tile_m, c),
                             lambda s, i: (s * tiles_per_split + i, 0)),  # yTrue
            ],
            out_specs=pl.BlockSpec((1, 1), lambda s, i: (s, 0)),
            scratch_shapes=[pltpu.VMEM((8, c), jnp.float32)],
        ),
        compiler_params=pltpu.CompilerParams(
            dimension_semantics=("parallel", "arbitrary"),
        ),
    )(alpha_arr, y_pred, y_true)

    return jnp.sum(partials) / jnp.float32(n)


def focal_loss_ref(y_pred, y_true, alpha, gamma=2):
    alpha_arr = jnp.asarray(alpha, jnp.float32)
    ce = -jnp.log(y_pred + EPS) * y_true
    fl = jnp.power(1.0 - y_pred, gamma) * ce
    fl = fl * alpha_arr                     # broadcasts over class dim (last)
    fl = jnp.sum(fl, axis=1)
    return jnp.mean(fl)


if __name__ == "__main__":
    key = jax.random.PRNGKey(0)
    k1, k2 = jax.random.split(key)

    # Small shapes; N deliberately not a multiple of 8 to exercise the
    # pad + row-mask path.
    N, C = 60, 128

    logits = jax.random.normal(k1, (N, C), dtype=jnp.float32)
    y_pred = jax.nn.softmax(logits, axis=1)          # valid probabilities

    labels = jax.random.randint(k2, (N,), 0, C)
    y_true = jax.nn.one_hot(labels, C, dtype=jnp.float32)

    alpha = jnp.linspace(0.25, 0.75, C, dtype=jnp.float32)
    gamma = 2

    ref = focal_loss_ref(y_pred, y_true, alpha, gamma=gamma)

    # 1) Default (large-tile) path: single tile covering all rows.
    out1 = jax.block_until_ready(focal_loss(y_pred, y_true, alpha, gamma=gamma))
    assert jnp.allclose(out1, ref, rtol=1e-5, atol=1e-6), (out1, ref)

    # 2) Small-tile path: exercises multi-tile accumulation, the 2-way
    #    "parallel" split, and the partial/padded last tile mask.
    out2 = jax.block_until_ready(
        focal_loss(y_pred, y_true, alpha, gamma=gamma, tile_m=16))
    assert jnp.allclose(out2, ref, rtol=1e-5, atol=1e-6), (out2, ref)

    print("KERNEL_OK")
</pallas_src>

<mosaic_0001>
module attributes {stable_mosaic.version = 11 : i64} {
  func.func @_focal_loss_kernel(%arg0: i32, %arg1: i32, %arg2: memref<1x128xf32, #tpu.memory_space<vmem>>, %arg3: memref<64x128xf32, #tpu.memory_space<vmem>>, %arg4: memref<64x128xf32, #tpu.memory_space<vmem>>, %arg5: memref<1x1xf32, #tpu.memory_space<vmem>>, %arg6: memref<8x128xf32, #tpu.memory_space<vmem>>) attributes {dimension_semantics = [#tpu.dimension_semantics<parallel>, #tpu.dimension_semantics<arbitrary>], iteration_bounds = array<i64: 1, 1>, scalar_prefetch = 0 : i64, scratch_operands = 1 : i64, tpu.core_type = #tpu.core_type<tc>, window_params = [{pipeline_mode = #tpu.pipeline_mode<synchronous>, transform_indices = @transform_0, window_bounds = array<i64: 1, 128>}, {transform_indices = @transform_1, window_bounds = array<i64: 64, 128>}, {transform_indices = @transform_2, window_bounds = array<i64: 64, 128>}, {transform_indices = @transform_3, window_bounds = array<i64: 1, 1>}]} {
    %c0_i32 = arith.constant 0 : i32
    %0 = arith.cmpi eq, %arg1, %c0_i32 : i32
    %1 = arith.extui %0 : i1 to i32
    %c0_i32_0 = arith.constant 0 : i32
    %2 = arith.cmpi ne, %1, %c0_i32_0 : i32
    scf.if %2 {
      %cst_14 = arith.constant 0.000000e+00 : f32
      %33 = vector.broadcast %cst_14 : f32 to vector<8x128xf32>
      %c0_15 = arith.constant 0 : index
      %c0_16 = arith.constant 0 : index
      %34 = vector.load %arg6[%c0_15, %c0_16] : memref<8x128xf32, #tpu.memory_space<vmem>>, vector<8x128xf32>
      tpu.vector_store %arg6[%c0_15, %c0_16], %33 {strides = array<i32>} : memref<8x128xf32, #tpu.memory_space<vmem>>, vector<8x128xf32>,
    } else {
    }
    %c0 = arith.constant 0 : index
    %c0_1 = arith.constant 0 : index
    %3 = vector.load %arg3[%c0, %c0_1] : memref<64x128xf32, #tpu.memory_space<vmem>>, vector<64x128xf32>
    %c0_2 = arith.constant 0 : index
    %c0_3 = arith.constant 0 : index
    %4 = vector.load %arg4[%c0_2, %c0_3] : memref<64x128xf32, #tpu.memory_space<vmem>>, vector<64x128xf32>
    %c1_i32 = arith.constant 1 : i32
    %5 = arith.muli %arg0, %c1_i32 : i32
    %6 = arith.addi %5, %arg1 : i32
    %c64_i32 = arith.constant 64 : i32
    %7 = arith.muli %6, %c64_i32 : i32
    %8 = tpu.iota {dimensions = array<i32: 0>} : vector<64x128xi32>
    %9 = vector.broadcast %7 : i32 to vector<64x128xi32>
    %10 = arith.addi %9, %8 : vector<64x128xi32>
    %c60_i32 = arith.constant 60 : i32
    %11 = vector.broadcast %c60_i32 : i32 to vector<64x128xi32>
    %12 = arith.cmpi slt, %10, %11 : vector<64x128xi32>
    %cst = arith.constant 1.000000e+00 : f32
    %13 = vector.broadcast %cst : f32 to vector<64x128xf32>
    %14 = arith.subf %13, %3 : vector<64x128xf32>
    %15 = arith.mulf %14, %14 : vector<64x128xf32>
    %cst_4 = arith.constant 1.000000e-07 : f32
    %16 = vector.broadcast %cst_4 : f32 to vector<64x128xf32>
    %17 = arith.addf %3, %16 : vector<64x128xf32>
    %18 = math.log %17 : vector<64x128xf32>
    %cst_5 = arith.constant 0.000000e+00 : f32
    %19 = vector.broadcast %cst_5 : f32 to vector<64x128xf32>
    %20 = arith.subf %19, %18 : vector<64x128xf32>
    %21 = arith.mulf %20, %4 : vector<64x128xf32>
    %22 = arith.mulf %15, %21 : vector<64x128xf32>
    %cst_6 = arith.constant 0.000000e+00 : f32
    %23 = vector.broadcast %cst_6 : f32 to vector<64x128xf32>
    %24 = arith.select %12, %22, %23 : vector<64x128xi1>, vector<64x128xf32>
    %c0_7 = arith.constant 0 : index
    %c0_8 = arith.constant 0 : index
    %25 = vector.load %arg6[%c0_7, %c0_8] : memref<8x128xf32, #tpu.memory_space<vmem>>, vector<8x128xf32>
    %26 = vector.shape_cast %24 : vector<64x128xf32> to vector<8x8x128xf32>
    %cst_9 = arith.constant dense<0.000000e+00> : vector<8x128xf32>
    %27 = vector.multi_reduction <add>, %26, %cst_9 [0] : vector<8x8x128xf32> to vector<8x128xf32>
    %28 = arith.addf %25, %27 : vector<8x128xf32>
    %c0_10 = arith.constant 0 : index
    %c0_11 = arith.constant 0 : index
    %29 = vector.load %arg6[%c0_10, %c0_11] : memref<8x128xf32, #tpu.memory_space<vmem>>, vector<8x128xf32>
    tpu.vector_store %arg6[%c0_10, %c0_11], %28 {strides = array<i32>} : memref<8x128xf32, #tpu.memory_space<vmem>>, vector<8x128xf32>,
    %c0_i32_12 = arith.constant 0 : i32
    %30 = arith.cmpi eq, %arg1, %c0_i32_12 : i32
    %31 = arith.extui %30 : i1 to i32
    %c0_i32_13 = arith.constant 0 : i32
    %32 = arith.cmpi ne, %31, %c0_i32_13 : i32
    scf.if %32 {
      %c0_14 = arith.constant 0 : index
      %c0_15 = arith.constant 0 : index
      %33 = vector.load %arg2[%c0_14, %c0_15] : memref<1x128xf32, #tpu.memory_space<vmem>>, vector<1x128xf32>
      %c0_16 = arith.constant 0 : index
      %c0_17 = arith.constant 0 : index
      %34 = vector.load %arg6[%c0_16, %c0_17] : memref<8x128xf32, #tpu.memory_space<vmem>>, vector<8x128xf32>
      %35 = vector.broadcast %33 : vector<1x128xf32> to vector<8x128xf32>
      %36 = arith.mulf %34, %35 : vector<8x128xf32>
      %37 = vector.shape_cast %36 : vector<8x128xf32> to vector<1x8x128xf32>
      %cst_18 = arith.constant dense<0.000000e+00> : vector<1xf32>
      %38 = vector.multi_reduction <add>, %37, %cst_18 [1, 2] : vector<1x8x128xf32> to vector<1xf32>
      %39 = vector.shape_cast %38 : vector<1xf32> to vector<1x1x1xf32>
      %40 = vector.extract %39[0, 0, 0] : f32 from vector<1x1x1xf32>
      %41 = vector.broadcast %40 : f32 to vector<1x1xf32>
      %c0_19 = arith.constant 0 : index
      %c0_20 = arith.constant 0 : index
      %42 = vector.load %arg5[%c0_19, %c0_20] : memref<1x1xf32, #tpu.memory_space<vmem>>, vector<1x1xf32>
      tpu.vector_store %arg5[%c0_19, %c0_20], %41 {strides = array<i32>} : memref<1x1xf32, #tpu.memory_space<vmem>>, vector<1x1xf32>,
    } else {
    }
    return
  }
  func.func @transform_0(%arg0: i32, %arg1: i32) -> (i32, i32) {
    %c0_i32 = arith.constant 0 : i32
    %c0_i32_0 = arith.constant 0 : i32
    %c0_i32_1 = arith.constant 0 : i32
    return %c0_i32, %c0_i32_0 : i32, i32
  }
  func.func @transform_1(%arg0: i32, %arg1: i32) -> (i32, i32) {
    %c1_i32 = arith.constant 1 : i32
    %0 = arith.muli %arg0, %c1_i32 : i32
    %1 = arith.addi %0, %arg1 : i32
    %c0_i32 = arith.constant 0 : i32
    %c0_i32_0 = arith.constant 0 : i32
    return %1, %c0_i32 : i32, i32
  }
  func.func @transform_2(%arg0: i32, %arg1: i32) -> (i32, i32) {
    %c1_i32 = arith.constant 1 : i32
    %0 = arith.muli %arg0, %c1_i32 : i32
    %1 = arith.addi %0, %arg1 : i32
    %c0_i32 = arith.constant 0 : i32
    %c0_i32_0 = arith.constant 0 : i32
    return %1, %c0_i32 : i32, i32
  }
  func.func @transform_3(%arg0: i32, %arg1: i32) -> (i32, i32) {
    %c0_i32 = arith.constant 0 : i32
    %c0_i32_0 = arith.constant 0 : i32
    return %arg0, %c0_i32 : i32, i32
  }
}

</mosaic_0001>

<llo_original>
// kernel: tpu_custom_call.1
$region0: #{tpu_custom_call.1}
  #allocation0 [shape = 'u32[]', space=smem, size = 0x4, offset = 0x4, fixed_abs, tag = 'smem constant byte address 0x4 - core index']
  #allocation1 [shape = 'u32[72,128]{1,0:T(1,128)}', space=vmem, size = 0x9000, scoped, tag = 'internal scratch']
  #allocation2 [shape = 'f32[8,128]{1,0:T(8,128)}', space=vmem, size = 0x1000, scoped, tag = 'scratch operand']
  %s0 = inlined_call_operand.hbm [shape: f32[1,128], index: 0, kind: input, shape index: {}]
  %s1 = inlined_call_operand.hbm [shape: f32[64,128], index: 1, kind: input, shape index: {}]
  %s2 = inlined_call_operand.hbm [shape: f32[64,128], index: 2, kind: input, shape index: {}]
  %s3 = inlined_call_operand.hbm [shape: f32[1,1], index: 3, kind: output, shape index: {}]
  %s4 = sld [smem:[#allocation0]]
  $region42: #{tpu_custom_call.1} parent=0
    _
  %s6 = ssub.s32 1, %s4
  %s7 = scalar_select 0, %s6, %s4
  $region1: #{tpu_custom_call.1} parent=0
    #allocation3 [shape = 'u8[512]{0}', space=vmem, size = 0x400, scoped, tag = 'input window, operand 0, single buffered']
    #allocation4 [shape = 's32[1]{0}', space=sflag, size = 0x4, scoped, tag = 'scoped memory for tpu_custom_call.1']
    #allocation5 [shape = 's32[1]{0}', space=sflag, size = 0x4, scoped, tag = 'scoped memory for tpu_custom_call.1']
    #allocation6 [shape = 'u8[32768]{0}', space=vmem, size = 0x8000, scoped, tag = 'input window, operand 1, single buffered']
    #allocation7 [shape = 's32[1]{0}', space=sflag, size = 0x4, scoped, tag = 'scoped memory for tpu_custom_call.1']
    #allocation8 [shape = 'u8[32768]{0}', space=vmem, size = 0x8000, scoped, tag = 'input window, operand 2, single buffered']
    #allocation9 [shape = 'u8[512]{0}', space=vmem, size = 0x400, scoped, tag = 'output window, operand 0, single buffered']
    %8 = vsyncpa [#allocation4], 0
    %9 = vsyncpa [#allocation7], 0
    %10 = vsyncpa [#allocation5], 0
    // Predicated region
    $region2: #{tpu_custom_call.1} parent=1 // pred_check
      _
    $region3: #{tpu_custom_call.1} parent=1 // pred_check_branch
      %12 = sbr.rel (0) target = $region5
    $region4: #{tpu_custom_call.1} parent=1 // pred_region
      %14 = vsyncadd [#allocation4], 0
      %s16 = sshll.u32 %s0, 4
      %s17 = int_to_ptr.hbm [resolvable:$true] %s16
      %s18 = sshll.u32 [#allocation3], 4
      %s19 = int_to_ptr.vmem [resolvable:$true] %s18
      %21 = dma.hbm_to_vmem [thread:$0]  %s17, 16, %s19, [#allocation4]
    $region5: #{tpu_custom_call.1} parent=1 // pred_fallthru
      _
    // Predicated region
    $region6: #{tpu_custom_call.1} parent=1 // pred_check
      _
    $region7: #{tpu_custom_call.1} parent=1 // pred_check_branch
      %23 = sbr.rel (0) target = $region9
    $region8: #{tpu_custom_call.1} parent=1 // pred_region
      %s24 = sadd.s32 0, 0
      %s25 = smul.u32 8, %s24
      %27 = vsyncadd [#allocation7], 0
      %s28 = smul.addr %s25, 8
      %s29 = scalar_lea.hbm %s1, %s28
      %s30 = sshll.u32 %s29, 4
      %s31 = int_to_ptr.hbm [resolvable:$true] %s30
      %s32 = sshll.u32 [#allocation6], 4
      %s33 = int_to_ptr.vmem [resolvable:$true] %s32
      %38 = dma.hbm_to_vmem [thread:$0]  %s31, 1024, %s33, [#allocation7], 128, 128, 8
    $region9: #{tpu_custom_call.1} parent=1 // pred_fallthru
      _
    // Predicated region
    $region10: #{tpu_custom_call.1} parent=1 // pred_check
      _
    $region11: #{tpu_custom_call.1} parent=1 // pred_check_branch
      %40 = sbr.rel (0) target = $region13
    $region12: #{tpu_custom_call.1} parent=1 // pred_region
      %s41 = sadd.s32 0, 0
      %s42 = smul.u32 8, %s41
      %44 = vsyncadd [#allocation7], 0
      %s45 = smul.addr %s42, 8
      %s46 = scalar_lea.hbm %s2, %s45
      %s47 = sshll.u32 %s46, 4
      %s48 = int_to_ptr.hbm [resolvable:$true] %s47
      %s49 = sshll.u32 [#allocation8], 4
      %s50 = int_to_ptr.vmem [resolvable:$true] %s49
      %55 = dma.hbm_to_vmem [thread:$0]  %s48, 1024, %s50, [#allocation7], 128, 128, 8
    $region13: #{tpu_custom_call.1} parent=1 // pred_fallthru
      _
    // Predicated region
    $region14: #{tpu_custom_call.1} parent=1 // pred_check
      _
    $region15: #{tpu_custom_call.1} parent=1 // pred_check_branch
      %57 = sbr.rel (0) target = $region17
    $region16: #{tpu_custom_call.1} parent=1 // pred_region
      %59 = dma.done [#allocation4], 16
    $region17: #{tpu_custom_call.1} parent=1 // pred_fallthru
      _
    // Predicated region
    $region18: #{tpu_custom_call.1} parent=1 // pred_check
      _
    $region19: #{tpu_custom_call.1} parent=1 // pred_check_branch
      %61 = sbr.rel (0) target = $region21
    $region20: #{tpu_custom_call.1} parent=1 // pred_region
      %63 = dma.done [#allocation7], 1024
    $region21: #{tpu_custom_call.1} parent=1 // pred_fallthru
      _
    // Predicated region
    $region22: #{tpu_custom_call.1} parent=1 // pred_check
      _
    $region23: #{tpu_custom_call.1} parent=1 // pred_check_branch
      %65 = sbr.rel (0) target = $region25
    $region24: #{tpu_custom_call.1} parent=1 // pred_region
      %67 = dma.done [#allocation7], 1024
    $region25: #{tpu_custom_call.1} parent=1 // pred_fallthru
      _
    %s68 = sadd.s32 0, 0
    %s69 = smul.u32 8, %s68
    %s70 = sadd.s32 0, 0
    %s71 = smul.u32 8, %s70
    %p72 = scmp.eq.s32.totalorder 0, 0
    // Predicated region
    $region26: #{tpu_custom_call.1} parent=1 // pred_check
      %p73 = pneg %p72
    $region27: #{tpu_custom_call.1} parent=1 // pred_check_branch
      %75 = sbr.rel (%p73) target = $region29
    $region28: #{tpu_custom_call.1} parent=1 // pred_region
      %76 = vst [vmem:[#allocation2] sm:$0xff] 0.0
    $region29: #{tpu_custom_call.1} parent=1 // pred_fallthru
      _
    %v77 = vld [vmem:[#allocation6] sm:$0xff]
    %v78 = vld [vmem:[#allocation6 + $0x8] sm:$0xff]
    %v79 = vld [vmem:[#allocation6 + $0x10] sm:$0xff]
    %v80 = vld [vmem:[#allocation6 + $0x18] sm:$0xff]
    %v81 = vld [vmem:[#allocation6 + $0x20] sm:$0xff]
    %v82 = vld [vmem:[#allocation6 + $0x28] sm:$0xff]
    %v83 = vld [vmem:[#allocation6 + $0x30] sm:$0xff]
    %v84 = vld [vmem:[#allocation6 + $0x38] sm:$0xff]
    %v85 = vld [vmem:[#allocation8] sm:$0xff]
    %v86 = vld [vmem:[#allocation8 + $0x8] sm:$0xff]
    %v87 = vld [vmem:[#allocation8 + $0x10] sm:$0xff]
    %v88 = vld [vmem:[#allocation8 + $0x18] sm:$0xff]
    %v89 = vld [vmem:[#allocation8 + $0x20] sm:$0xff]
    %v90 = vld [vmem:[#allocation8 + $0x28] sm:$0xff]
    %v91 = vld [vmem:[#allocation8 + $0x30] sm:$0xff]
    %v92 = vld [vmem:[#allocation8 + $0x38] sm:$0xff]
    %s93 = sadd.s32 0, 0
    %s94 = smul.u32 %s93, 64
    %v95 = vlaneseq
    %v96 = vshrl.u32 %v95, 7
    %v97 = vadd.s32 %v96, 8
    %v98 = vadd.s32 %v96, 16
    %v99 = vadd.s32 %v96, 24
    %v100 = vadd.s32 %v96, 32
    %v101 = vadd.s32 %v96, 40
    %v102 = vadd.s32 %v96, 48
    %v103 = vadd.s32 %v96, 56
    %v104 = vstv %s94
    %v105 = vadd.s32 %v104, %v96
    %v106 = vadd.s32 %v104, %v97
    %v107 = vadd.s32 %v104, %v98
    %v108 = vadd.s32 %v104, %v99
    %v109 = vadd.s32 %v104, %v100
    %v110 = vadd.s32 %v104, %v101
    %v111 = vadd.s32 %v104, %v102
    %v112 = vadd.s32 %v104, %v103
    %vm113 = vcmp.lt.s32.totalorder %v105, 60
    %vm114 = vcmp.lt.s32.totalorder %v106, 60
    %vm115 = vcmp.lt.s32.totalorder %v107, 60
    %vm116 = vcmp.lt.s32.totalorder %v108, 60
    %vm117 = vcmp.lt.s32.totalorder %v109, 60
    %vm118 = vcmp.lt.s32.totalorder %v110, 60
    %vm119 = vcmp.lt.s32.totalorder %v111, 60
    %vm120 = vcmp.lt.s32.totalorder %v112, 60
    %v121 = vsub.f32 1.0, %v77
    %v122 = vsub.f32 1.0, %v78
    %v123 = vsub.f32 1.0, %v79
    %v124 = vsub.f32 1.0, %v80
    %v125 = vsub.f32 1.0, %v81
    %v126 = vsub.f32 1.0, %v82
    %v127 = vsub.f32 1.0, %v83
    %v128 = vsub.f32 1.0, %v84
    %v129 = vmul.f32 %v121, %v121
    %v130 = vmul.f32 %v122, %v122
    %v131 = vmul.f32 %v123, %v123
    %v132 = vmul.f32 %v124, %v124
    %v133 = vmul.f32 %v125, %v125
    %v134 = vmul.f32 %v126, %v126
    %v135 = vmul.f32 %v127, %v127
    %v136 = vmul.f32 %v128, %v128
    %v137 = vadd.f32 %v77, 1e-07
    %v138 = vadd.f32 %v78, 1e-07
    %v139 = vadd.f32 %v79, 1e-07
    %v140 = vadd.f32 %v80, 1e-07
    %v141 = vadd.f32 %v81, 1e-07
    %v142 = vadd.f32 %v82, 1e-07
    %v143 = vadd.f32 %v83, 1e-07
    %v144 = vadd.f32 %v84, 1e-07
    %v145 = vlog2.pop %v137
    %v146 = vmul.f32 %v145, 0.6931472
    %v147 = vlog2.pop %v138
    %v148 = vmul.f32 %v147, 0.6931472
    %v149 = vlog2.pop %v139
    %v150 = vmul.f32 %v149, 0.6931472
    %v151 = vlog2.pop %v140
    %v152 = vmul.f32 %v151, 0.6931472
    %v153 = vlog2.pop %v141
    %v154 = vmul.f32 %v153, 0.6931472
    %v155 = vlog2.pop %v142
    %v156 = vmul.f32 %v155, 0.6931472
    %v157 = vlog2.pop %v143
    %v158 = vmul.f32 %v157, 0.6931472
    %v159 = vlog2.pop %v144
    %v160 = vmul.f32 %v159, 0.6931472
    %v161 = vsub.f32 0.0, %v146
    %v162 = vsub.f32 0.0, %v148
    %v163 = vsub.f32 0.0, %v150
    %v164 = vsub.f32 0.0, %v152
    %v165 = vsub.f32 0.0, %v154
    %v166 = vsub.f32 0.0, %v156
    %v167 = vsub.f32 0.0, %v158
    %v168 = vsub.f32 0.0, %v160
    %v169 = vmul.f32 %v161, %v85
    %v170 = vmul.f32 %v162, %v86
    %v171 = vmul.f32 %v163, %v87
    %v172 = vmul.f32 %v164, %v88
    %v173 = vmul.f32 %v165, %v89
    %v174 = vmul.f32 %v166, %v90
    %v175 = vmul.f32 %v167, %v91
    %v176 = vmul.f32 %v168, %v92
    %v177 = vmul.f32 %v129, %v169
    %v178 = vmul.f32 %v130, %v170
    %v179 = vmul.f32 %v131, %v171
    %v180 = vmul.f32 %v132, %v172
    %v181 = vmul.f32 %v133, %v173
    %v182 = vmul.f32 %v134, %v174
    %v183 = vmul.f32 %v135, %v175
    %v184 = vmul.f32 %v136, %v176
    %v185 = vsel %vm113, %v177, 0.0
    %v186 = vsel %vm114, %v178, 0.0
    %v187 = vsel %vm115, %v179, 0.0
    %v188 = vsel %vm116, %v180, 0.0
    %v189 = vsel %vm117, %v181, 0.0
    %v190 = vsel %vm118, %v182, 0.0
    %v191 = vsel %vm119, %v183, 0.0
    %v192 = vsel %vm120, %v184, 0.0
    %v193 = vld [vmem:[#allocation2] sm:$0xff]
    %v194 = vadd.f32 %v185, %v186
    %v195 = vadd.f32 %v194, %v187
    %v196 = vadd.f32 %v195, %v188
    %v197 = vadd.f32 %v196, %v189
    %v198 = vadd.f32 %v197, %v190
    %v199 = vadd.f32 %v198, %v191
    %v200 = vadd.f32 %v199, %v192
    %v201 = vadd.f32 %v193, %v200
    %202 = vst [vmem:[#allocation2] sm:$0xff] %v201
    // Predicated region
    $region30: #{tpu_custom_call.1} parent=1 // pred_check
      %p203 = pneg %p72
    $region31: #{tpu_custom_call.1} parent=1 // pred_check_branch
      %205 = sbr.rel (%p203) target = $region33
    $region32: #{tpu_custom_call.1} parent=1 // pred_region
      %v206 = vld [vmem:[#allocation3] sm:$0x1]
      %v207 = vld [vmem:[#allocation2] sm:$0xff]
      %v209 = vperm.slane %v206, 0
      %v211 = vmul.f32 %v207, %v209
      %212 = vadd.xlane.f32.xlu0 %v211
      %v213 = vpop.xlane.xlu0 %212
      %v214 = vrot.slane %v213, 4
      %v215 = vadd.f32 %v213, %v214
      %v216 = vrot.slane %v215, 2
      %v217 = vadd.f32 %v215, %v216
      %v218 = vrot.slane %v217, 1
      %v219 = vadd.f32 %v217, %v218
      %s220 = vtos %v219
      %v221 = vstv %s220
      %vm222 = vcmask 0
      %223 = vst.msk [vmem:[#allocation9] sm:$0x1] %vm222, %v221
    $region33: #{tpu_custom_call.1} parent=1 // pred_fallthru
      _
    // Predicated region
    $region34: #{tpu_custom_call.1} parent=1 // pred_check
      _
    $region35: #{tpu_custom_call.1} parent=1 // pred_check_branch
      %225 = sbr.rel (0) target = $region37
    $region36: #{tpu_custom_call.1} parent=1 // pred_region
      %227 = vsyncadd [#allocation5], 0
      %s229 = sshll.u32 [#allocation9], 4
      %s230 = int_to_ptr.vmem [resolvable:$true] %s229
      %s231 = sshll.u32 %s3, 4
      %s232 = int_to_ptr.hbm [resolvable:$true] %s231
      %234 = dma.vmem_to_hbm [thread:$0]  %s230, 16, %s232, [#allocation5]
    $region37: #{tpu_custom_call.1} parent=1 // pred_fallthru
      _
    // Predicated region
    $region38: #{tpu_custom_call.1} parent=1 // pred_check
      _
    $region39: #{tpu_custom_call.1} parent=1 // pred_check_branch
      %236 = sbr.rel (0) target = $region41
    $region40: #{tpu_custom_call.1} parent=1 // pred_region
      %238 = dma.done [#allocation5], 16
    $region41: #{tpu_custom_call.1} parent=1 // pred_fallthru
      _
    %239 = vsyncpa [#allocation4], 1
    %240 = vsyncpa [#allocation7], 1
    %241 = vsyncpa [#allocation5], 1

</llo_original>
